<compile_context>
chip_gen: v6e
topology: v6e:2x2x1
jax: 0.10.0
libtpu: 0.0.40
codegen_flags: <defaults>
</compile_context>

<pallas_src>
import math

import jax
import jax.numpy as jnp
from jax.experimental import pallas as pl
from jax.experimental.pallas import tpu as pltpu


def _make_dma_concat_kernel(num_inputs, inner_sizes):
    """Kernel that DMA-copies each HBM input into its slice of the HBM output."""
    offsets = []
    off = 0
    for s in inner_sizes:
        offsets.append(off)
        off += s

    def kernel(*refs):
        in_refs = refs[:num_inputs]
        out_ref = refs[num_inputs]
        sem = refs[num_inputs + 1]
        copies = []
        # Start all HBM->HBM DMAs (they run concurrently on the DMA engines) ...
        for i, r in enumerate(in_refs):
            dst = out_ref.at[:, offsets[i]:offsets[i] + inner_sizes[i]]
            cp = pltpu.make_async_copy(r, dst, sem.at[i])
            cp.start()
            copies.append(cp)
        # ... then wait for completion of every one.
        for cp in copies:
            cp.wait()

    return kernel


def concatenate(inputs, dim: int = 1):
    """Pallas equivalent of Concatenate(dim).forward(inputs) == torch.cat(inputs, dim)."""
    assert isinstance(inputs, (list, tuple)) and len(inputs) > 0
    ndim = inputs[0].ndim
    axis = dim % ndim

    # torch.cat promotes mixed dtypes; mirror that (no-op for same-dtype inputs).
    dtype = jnp.result_type(*[x.dtype for x in inputs])
    inputs = [jnp.asarray(x, dtype) for x in inputs]

    lead = inputs[0].shape[:axis]
    trail = inputs[0].shape[axis + 1:]
    for x in inputs:
        assert x.ndim == ndim
        assert x.shape[:axis] == lead and x.shape[axis + 1:] == trail, \
            "non-concat dims must match"

    rows = math.prod(lead) if lead else 1
    trail_sz = math.prod(trail) if trail else 1
    inner_sizes = [int(x.shape[axis]) * trail_sz for x in inputs]
    total_inner = sum(inner_sizes)
    out_full_shape = lead + (sum(int(x.shape[axis]) for x in inputs),) + trail

    # NOTE: for tiny inputs (a few KiB) the pallas_call boundary dominates and
    # letting XLA fuse jnp.concatenate into the consumer is preferable; this DMA
    # kernel is the right tool once feature maps are large and HBM-resident.
    flat_inputs = [x.reshape(rows, s) for x, s in zip(inputs, inner_sizes)]

    kernel = _make_dma_concat_kernel(len(inputs), inner_sizes)

    out_flat = pl.pallas_call(
        kernel,
        out_shape=jax.ShapeDtypeStruct((rows, total_inner), dtype),
        in_specs=[pl.BlockSpec(memory_space=pl.ANY) for _ in inputs],
        out_specs=pl.BlockSpec(memory_space=pl.ANY),
        scratch_shapes=[pltpu.SemaphoreType.DMA((len(inputs),))],
    )(*flat_inputs)

    return out_flat.reshape(out_full_shape)


if __name__ == "__main__":
    key = jax.random.PRNGKey(0)
    k1, k2, k3 = jax.random.split(key, 3)

    # NCHW feature maps with differing channel counts, as the neck would see.
    x1 = jax.random.normal(k1, (2, 4, 16, 16), dtype=jnp.float32)
    x2 = jax.random.normal(k2, (2, 3, 16, 16), dtype=jnp.float32)
    x3 = jax.random.normal(k3, (2, 5, 16, 16), dtype=jnp.float32)
    inputs = [x1, x2, x3]

    out = concatenate(inputs, dim=1)
    out = jax.block_until_ready(out)
    ref = jnp.concatenate(inputs, axis=1)
    assert out.shape == (2, 12, 16, 16), out.shape
    assert out.dtype == ref.dtype
    assert jnp.array_equal(out, ref), "Pallas concat mismatch vs jnp.concatenate (dim=1)"

    # Exercise a different concat axis (last dim) through the generic layout path.
    y1 = jax.random.normal(k1, (2, 4, 16, 8), dtype=jnp.float32)
    y2 = jax.random.normal(k2, (2, 4, 16, 24), dtype=jnp.float32)
    out2 = jax.block_until_ready(concatenate([y1, y2], dim=-1))
    ref2 = jnp.concatenate([y1, y2], axis=-1)
    assert out2.shape == ref2.shape and jnp.array_equal(out2, ref2), \
        "Pallas concat mismatch vs jnp.concatenate (dim=-1)"

    print("KERNEL_OK")
</pallas_src>

<mosaic_0001>
module attributes {stable_mosaic.version = 11 : i64} {
  func.func @kernel(%arg0: memref<2x1024xf32, #tpu.memory_space<any>>, %arg1: memref<2x768xf32, #tpu.memory_space<any>>, %arg2: memref<2x1280xf32, #tpu.memory_space<any>>, %arg3: memref<2x3072xf32, #tpu.memory_space<any>>, %arg4: memref<3x!tpu.dma_semaphore, #tpu.memory_space<semaphore_mem>>) attributes {dimension_semantics = [], scalar_prefetch = 0 : i64, scratch_operands = 1 : i64, tpu.core_type = #tpu.core_type<tc>} {
    %c0_i32 = arith.constant 0 : i32
    %c0_i32_0 = arith.constant 0 : i32
    %c0_i32_1 = arith.constant 0 : i32
    %0 = tpu.memref_slice %arg3[%c0_i32_0, %c0_i32_1] : memref<2x3072xf32, #tpu.memory_space<any>> -> memref<2x1024xf32, #tpu.memory_space<any>>
    %1 = tpu.memref_slice %arg4[%c0_i32] : memref<3x!tpu.dma_semaphore, #tpu.memory_space<semaphore_mem>> -> memref<1x!tpu.dma_semaphore, #tpu.memory_space<semaphore_mem>>
    %2 = tpu.memref_squeeze %1 : memref<1x!tpu.dma_semaphore, #tpu.memory_space<semaphore_mem>> -> memref<!tpu.dma_semaphore, #tpu.memory_space<semaphore_mem>>
    tpu.enqueue_dma source(%arg0 : memref<2x1024xf32, #tpu.memory_space<any>>) target(%0 : memref<2x1024xf32, #tpu.memory_space<any>>) target_semaphore(%2 : memref<!tpu.dma_semaphore, #tpu.memory_space<semaphore_mem>>)
    %c1_i32 = arith.constant 1 : i32
    %c0_i32_2 = arith.constant 0 : i32
    %c1024_i32 = arith.constant 1024 : i32
    %3 = tpu.memref_slice %arg3[%c0_i32_2, %c1024_i32] : memref<2x3072xf32, #tpu.memory_space<any>> -> memref<2x768xf32, #tpu.memory_space<any>>
    %4 = tpu.memref_slice %arg4[%c1_i32] : memref<3x!tpu.dma_semaphore, #tpu.memory_space<semaphore_mem>> -> memref<1x!tpu.dma_semaphore, #tpu.memory_space<semaphore_mem>>
    %5 = tpu.memref_squeeze %4 : memref<1x!tpu.dma_semaphore, #tpu.memory_space<semaphore_mem>> -> memref<!tpu.dma_semaphore, #tpu.memory_space<semaphore_mem>>
    tpu.enqueue_dma source(%arg1 : memref<2x768xf32, #tpu.memory_space<any>>) target(%3 : memref<2x768xf32, #tpu.memory_space<any>>) target_semaphore(%5 : memref<!tpu.dma_semaphore, #tpu.memory_space<semaphore_mem>>)
    %c2_i32 = arith.constant 2 : i32
    %c0_i32_3 = arith.constant 0 : i32
    %c1792_i32 = arith.constant 1792 : i32
    %6 = tpu.memref_slice %arg3[%c0_i32_3, %c1792_i32] : memref<2x3072xf32, #tpu.memory_space<any>> -> memref<2x1280xf32, #tpu.memory_space<any>>
    %7 = tpu.memref_slice %arg4[%c2_i32] : memref<3x!tpu.dma_semaphore, #tpu.memory_space<semaphore_mem>> -> memref<1x!tpu.dma_semaphore, #tpu.memory_space<semaphore_mem>>
    %8 = tpu.memref_squeeze %7 : memref<1x!tpu.dma_semaphore, #tpu.memory_space<semaphore_mem>> -> memref<!tpu.dma_semaphore, #tpu.memory_space<semaphore_mem>>
    tpu.enqueue_dma source(%arg2 : memref<2x1280xf32, #tpu.memory_space<any>>) target(%6 : memref<2x1280xf32, #tpu.memory_space<any>>) target_semaphore(%8 : memref<!tpu.dma_semaphore, #tpu.memory_space<semaphore_mem>>)
    %c0_i32_4 = arith.constant 0 : i32
    %c0_i32_5 = arith.constant 0 : i32
    %c0_i32_6 = arith.constant 0 : i32
    %9 = tpu.memref_slice %arg3[%c0_i32_5, %c0_i32_6] : memref<2x3072xf32, #tpu.memory_space<any>> -> memref<2x1024xf32, #tpu.memory_space<any>>
    %10 = tpu.memref_slice %arg4[%c0_i32_4] : memref<3x!tpu.dma_semaphore, #tpu.memory_space<semaphore_mem>> -> memref<1x!tpu.dma_semaphore, #tpu.memory_space<semaphore_mem>>
    %11 = tpu.memref_squeeze %10 : memref<1x!tpu.dma_semaphore, #tpu.memory_space<semaphore_mem>> -> memref<!tpu.dma_semaphore, #tpu.memory_space<semaphore_mem>>
    tpu.wait_dma2 semaphore(%11 : memref<!tpu.dma_semaphore, #tpu.memory_space<semaphore_mem>>) src(%arg0 : memref<2x1024xf32, #tpu.memory_space<any>>) dst(%9 : memref<2x1024xf32, #tpu.memory_space<any>>)
    %c1_i32_7 = arith.constant 1 : i32
    %c0_i32_8 = arith.constant 0 : i32
    %c1024_i32_9 = arith.constant 1024 : i32
    %12 = tpu.memref_slice %arg3[%c0_i32_8, %c1024_i32_9] : memref<2x3072xf32, #tpu.memory_space<any>> -> memref<2x768xf32, #tpu.memory_space<any>>
    %13 = tpu.memref_slice %arg4[%c1_i32_7] : memref<3x!tpu.dma_semaphore, #tpu.memory_space<semaphore_mem>> -> memref<1x!tpu.dma_semaphore, #tpu.memory_space<semaphore_mem>>
    %14 = tpu.memref_squeeze %13 : memref<1x!tpu.dma_semaphore, #tpu.memory_space<semaphore_mem>> -> memref<!tpu.dma_semaphore, #tpu.memory_space<semaphore_mem>>
    tpu.wait_dma2 semaphore(%14 : memref<!tpu.dma_semaphore, #tpu.memory_space<semaphore_mem>>) src(%arg1 : memref<2x768xf32, #tpu.memory_space<any>>) dst(%12 : memref<2x768xf32, #tpu.memory_space<any>>)
    %c2_i32_10 = arith.constant 2 : i32
    %c0_i32_11 = arith.constant 0 : i32
    %c1792_i32_12 = arith.constant 1792 : i32
    %15 = tpu.memref_slice %arg3[%c0_i32_11, %c1792_i32_12] : memref<2x3072xf32, #tpu.memory_space<any>> -> memref<2x1280xf32, #tpu.memory_space<any>>
    %16 = tpu.memref_slice %arg4[%c2_i32_10] : memref<3x!tpu.dma_semaphore, #tpu.memory_space<semaphore_mem>> -> memref<1x!tpu.dma_semaphore, #tpu.memory_space<semaphore_mem>>
    %17 = tpu.memref_squeeze %16 : memref<1x!tpu.dma_semaphore, #tpu.memory_space<semaphore_mem>> -> memref<!tpu.dma_semaphore, #tpu.memory_space<semaphore_mem>>
    tpu.wait_dma2 semaphore(%17 : memref<!tpu.dma_semaphore, #tpu.memory_space<semaphore_mem>>) src(%arg2 : memref<2x1280xf32, #tpu.memory_space<any>>) dst(%15 : memref<2x1280xf32, #tpu.memory_space<any>>)
    return
  }
}

</mosaic_0001>

<llo_original>
// kernel: tpu_custom_call.1
$region0: #{tpu_custom_call.1}
  #allocation0 [shape = 'u32[]', space=smem, size = 0x4, offset = 0x4, fixed_abs, tag = 'smem constant byte address 0x4 - core index']
  #allocation1 [shape = 'u32[144,128]{1,0:T(1,128)}', space=vmem, size = 0x12000, scoped, tag = 'internal scratch']
  #allocation2 [shape = 's32[3]{0}', space=sflag, size = 0xc, scoped, tag = 'scratch operand']
  #allocation3 [shape = 's32[]', space=sflag, size = 0x4, offset = 0, fixed_abs, tag = 'sflag constant byte address 0x0 - dummy sync flag']
  #allocation4 [shape = 'u32[0]{0}', space=smem, size = 0, offset = 0, fixed_abs, tag = 'smem constant byte address 0x0 - null']
  #allocation5 [shape = 's32[]', space=sflag, size = 0x4, offset = 0, fixed_abs, tag = 'sflag constant byte address 0x0 - dummy sync flag']
  #allocation6 [shape = 'u32[0]{0}', space=smem, size = 0, offset = 0, fixed_abs, tag = 'smem constant byte address 0x0 - null']
  #allocation7 [shape = 's32[]', space=sflag, size = 0x4, offset = 0, fixed_abs, tag = 'sflag constant byte address 0x0 - dummy sync flag']
  #allocation8 [shape = 'u32[0]{0}', space=smem, size = 0, offset = 0, fixed_abs, tag = 'smem constant byte address 0x0 - null']
  %s0 = inlined_call_operand.hbm [shape: f32[2,1024], index: 0, kind: input, shape index: {}]
  %s1 = inlined_call_operand.hbm [shape: f32[2,768], index: 1, kind: input, shape index: {}]
  %s2 = inlined_call_operand.hbm [shape: f32[2,1280], index: 2, kind: input, shape index: {}]
  %s3 = inlined_call_operand.hbm [shape: f32[2,3072], index: 3, kind: output, shape index: {}]
  %s4 = sld [smem:[#allocation0]]
  $region2: #{tpu_custom_call.1} parent=0
    _
  %s6 = ssub.s32 1, %s4
  %s7 = scalar_select 0, %s6, %s4
  %s9 = sshll.u32 1, 14
  %s10 = sxor.u32 4294967295, %s9
  %14 = dma.general %s0, 256, %s3, [#allocation2], 131072, [#allocation4], 0, 0
  %s15 = scalar_lea.hbm %s3, 256
  %s16 = scalar_lea.sflag [#allocation2], 1
  %s18 = sshll.u32 1, 14
  %s19 = sxor.u32 4294967295, %s18
  %23 = dma.general %s1, 192, %s15, %s16, 131072, [#allocation6], 0, 0
  %s24 = scalar_lea.hbm %s3, 448
  %s25 = scalar_lea.sflag [#allocation2], 2
  %s27 = sshll.u32 1, 14
  %s28 = sxor.u32 4294967295, %s27
  %32 = dma.general %s2, 320, %s24, %s25, 131072, [#allocation8], 0, 0
  %s33 = smul.u32 2, 1
  %s34 = smul.u32 %s33, 8
  %s35 = sshll.u32 %s34, 4
  %36 = dma.done [#allocation2], %s35
  %s37 = smul.u32 %s33, 6
  %s38 = sshll.u32 %s37, 4
  %39 = dma.done %s16, %s38
  %s40 = smul.u32 %s33, 10
  %s41 = sshll.u32 %s40, 4
  %42 = dma.done %s25, %s41
  %43 = vsyncmov [#allocation2]
  %s44 = vpop.sfrf %43
  %p45 = scmp.eq.s32.totalorder %s44, 0
  %p46 = pneg %p45
  %48 = shalt.err (%p46)
  %s49 = scalar_lea.sflag [#allocation2], 1
  %50 = vsyncmov %s49
  %s51 = vpop.sfrf %50
  %p52 = scmp.eq.s32.totalorder %s51, 0
  %p53 = pneg %p52
  %55 = shalt.err (%p53)
  %s56 = scalar_lea.sflag [#allocation2], 2
  %57 = vsyncmov %s56
  %s58 = vpop.sfrf %57
  %p59 = scmp.eq.s32.totalorder %s58, 0
  %p60 = pneg %p59
  %62 = shalt.err (%p60)

</llo_original>
